<compile_context>
chip_gen: v5e
topology: v5e:2x2
jax: 0.10.0
libtpu: 0.0.40
codegen_flags: <defaults>
</compile_context>

<pallas_src>
import math
import functools

import jax
import jax.numpy as jnp
from jax.experimental import pallas as pl
from jax.experimental.pallas import tpu as pltpu

PAD_ID, CLS_ID, MASK_ID = 0, 1, 2
NEG = -1e30

# M-tile preference (kept VMEM-safe for v7x's 64 MiB while giving good weight
# reuse on v5e/v6e); the vocab head uses 512 on both axes.
TM = 512
TN_VOCAB = 512


# ----------------------------- tiling helpers ------------------------------

def _round_up(x, m):
    return ((x + m - 1) // m) * m


def _tile_for(dim, pref):
    """Return (tile, padded_dim): full-extent block when dim <= pref, else a
    128-multiple tile (padding only when no clean divisor exists)."""
    if dim <= pref:
        return dim, dim
    for cand in range(pref, 127, -128):
        if dim % cand == 0:
            return cand, dim
    return pref, _round_up(dim, pref)


def _pad2(x, rows, cols):
    pr, pc = rows - x.shape[0], cols - x.shape[1]
    if pr or pc:
        x = jnp.pad(x, ((0, pr), (0, pc)))
    return x


# ----------------------------- Pallas kernels ------------------------------

def _linear_kernel(x_ref, w_ref, b_ref, o_ref, *, activation):
    y = jnp.dot(x_ref[...], w_ref[...],
                preferred_element_type=jnp.float32) + b_ref[...]
    if activation == "tanh":
        y = jnp.tanh(y)
    o_ref[...] = y.astype(o_ref.dtype)


def pallas_linear(x, w, b, activation=None, out_dtype=jnp.float32):
    """y = act(x @ w + b) with the full (K, N) weight + bias VMEM-resident
    (grid only over M) — right call for the ~hidden x hidden weights here.
    # TODO(synk): fall back to a K-reduction grid axis for weights too large
    # to keep resident in VMEM.
    """
    M, K = x.shape
    N = w.shape[1]
    tm, Mp = _tile_for(M, TM)
    xp = _pad2(x.astype(jnp.bfloat16), Mp, K)
    wb = w.astype(jnp.bfloat16)
    bp = jnp.asarray(b, jnp.float32).reshape(1, N)
    out = pl.pallas_call(
        functools.partial(_linear_kernel, activation=activation),
        out_shape=jax.ShapeDtypeStruct((Mp, N), out_dtype),
        grid=(Mp // tm,),
        in_specs=[pl.BlockSpec((tm, K), lambda i: (i, 0)),
                  pl.BlockSpec((K, N), lambda i: (0, 0)),
                  pl.BlockSpec((1, N), lambda i: (0, 0))],
        out_specs=pl.BlockSpec((tm, N), lambda i: (i, 0)),
        compiler_params=pltpu.CompilerParams(
            dimension_semantics=("parallel",)),
    )(xp, wb, bp)
    return out[:M] if Mp != M else out


def _gen_vocab_ce_kernel(h_ref, w_ref, b_ref, lab_ref, g_ref,
                         nll_ref, samp_ref,
                         m_s, l_s, pick_s, best_s, bidx_s,
                         *, vocab, tn, need_mask, inv_temp):
    j = pl.program_id(1)
    nj = pl.num_programs(1)

    @pl.when(j == 0)
    def _():
        m_s[...] = jnp.full_like(m_s, NEG)
        l_s[...] = jnp.zeros_like(l_s)
        pick_s[...] = jnp.zeros_like(pick_s)
        best_s[...] = jnp.full_like(best_s, NEG)
        bidx_s[...] = jnp.zeros_like(bidx_s)

    logits = jnp.dot(h_ref[...], w_ref[...],
                     preferred_element_type=jnp.float32) + b_ref[...]
    # lane-only iota keeps the int temporaries off the (tm, tn) footprint.
    cols = j * tn + jax.lax.broadcasted_iota(jnp.int32, (1, tn), 1)
    if need_mask:                       # only when the vocab was padded
        logits = jnp.where(cols < vocab, logits, NEG)

    # --- online logsumexp + picked-label logit (masked cross entropy) ---
    tile_max = jnp.max(logits, axis=-1, keepdims=True)
    m_new = jnp.maximum(m_s[...], tile_max)
    l_s[...] = (jnp.exp(m_s[...] - m_new) * l_s[...]
                + jnp.sum(jnp.exp(logits - m_new), axis=-1, keepdims=True))
    m_s[...] = m_new
    pick_s[...] += jnp.sum(jnp.where(cols == lab_ref[...], logits, 0.0),
                           axis=-1, keepdims=True)

    # --- Gumbel-argmax sampling (precomputed bf16 noise, online argmax) ---
    cand = logits * inv_temp + g_ref[...].astype(jnp.float32)
    tile_best = jnp.max(cand, axis=-1, keepdims=True)
    tile_arg = jnp.min(jnp.where(cand >= tile_best, cols, jnp.int32(2 ** 30)),
                       axis=-1, keepdims=True)
    take = tile_best > best_s[...]
    best_s[...] = jnp.where(take, tile_best, best_s[...])
    bidx_s[...] = jnp.where(take, tile_arg, bidx_s[...])

    @pl.when(j == nj - 1)
    def _():
        nll_ref[...] = m_s[...] + jnp.log(l_s[...]) - pick_s[...]
        samp_ref[...] = bidx_s[...]


def pallas_gen_vocab_ce_sample(h, w2, b2, labels, gumbel, *, temperature):
    """Fused generator head on the masked rows: logits = h @ w2 + b2; returns
    per-row NLL(label) and a Gumbel-argmax sample.  Logits never leave VMEM."""
    M, H = h.shape
    V = w2.shape[1]
    tm, Mp = _tile_for(M, TM)
    tn, Vp = _tile_for(V, TN_VOCAB)
    hp = _pad2(h.astype(jnp.bfloat16), Mp, H)
    wp = _pad2(w2.astype(jnp.bfloat16), H, Vp)
    bp = _pad2(jnp.asarray(b2, jnp.float32).reshape(1, V), 1, Vp)
    labp = _pad2(labels.reshape(M, 1).astype(jnp.int32), Mp, 1)
    gp = _pad2(gumbel.astype(jnp.bfloat16), Mp, Vp)

    kern = functools.partial(_gen_vocab_ce_kernel, vocab=V, tn=tn,
                             need_mask=(Vp != V),
                             inv_temp=float(1.0 / temperature))
    nll, samp = pl.pallas_call(
        kern,
        out_shape=(jax.ShapeDtypeStruct((Mp, 1), jnp.float32),
                   jax.ShapeDtypeStruct((Mp, 1), jnp.int32)),
        grid=(Mp // tm, Vp // tn),
        in_specs=[pl.BlockSpec((tm, H), lambda i, j: (i, 0)),
                  pl.BlockSpec((H, tn), lambda i, j: (0, j)),
                  pl.BlockSpec((1, tn), lambda i, j: (0, j)),
                  pl.BlockSpec((tm, 1), lambda i, j: (i, 0)),
                  pl.BlockSpec((tm, tn), lambda i, j: (i, j))],
        out_specs=(pl.BlockSpec((tm, 1), lambda i, j: (i, 0)),
                   pl.BlockSpec((tm, 1), lambda i, j: (i, 0))),
        scratch_shapes=[pltpu.VMEM((tm, 1), jnp.float32),
                        pltpu.VMEM((tm, 1), jnp.float32),
                        pltpu.VMEM((tm, 1), jnp.float32),
                        pltpu.VMEM((tm, 1), jnp.float32),
                        pltpu.VMEM((tm, 1), jnp.int32)],
        compiler_params=pltpu.CompilerParams(
            dimension_semantics=("parallel", "arbitrary")),
    )(hp, wp, bp, labp, gp)
    return nll[:M, 0], samp[:M, 0]


def _disc_corr_kernel(e_ref, w_ref, b_ref, cw_ref, corr_ref):
    h = jnp.tanh(jnp.dot(e_ref[...], w_ref[...],
                         preferred_element_type=jnp.float32) + b_ref[...])
    corr_ref[...] = jnp.sum(h * cw_ref[...], axis=-1, keepdims=True)


def pallas_disc_corr_logits(e, disc_w, disc_b, corr_w):
    """corr = tanh(e @ disc_w + disc_b) @ corr_w with the full (D, D) weight
    VMEM-resident and the (M, D) hidden activations never written to HBM."""
    M, Kin = e.shape
    D = disc_w.shape[1]
    tm, Mp = _tile_for(M, TM)
    ep = _pad2(e.astype(jnp.bfloat16), Mp, Kin)
    wb = disc_w.astype(jnp.bfloat16)
    bp = jnp.asarray(disc_b, jnp.float32).reshape(1, D)
    cwp = jnp.asarray(corr_w, jnp.float32).reshape(1, D)
    out = pl.pallas_call(
        _disc_corr_kernel,
        out_shape=jax.ShapeDtypeStruct((Mp, 1), jnp.float32),
        grid=(Mp // tm,),
        in_specs=[pl.BlockSpec((tm, Kin), lambda i: (i, 0)),
                  pl.BlockSpec((Kin, D), lambda i: (0, 0)),
                  pl.BlockSpec((1, D), lambda i: (0, 0)),
                  pl.BlockSpec((1, D), lambda i: (0, 0))],
        out_specs=pl.BlockSpec((tm, 1), lambda i: (i, 0)),
        compiler_params=pltpu.CompilerParams(
            dimension_semantics=("parallel",)),
    )(ep, wb, bp, cwp)
    return out[:M, 0]


def _masked_bce_kernel(x_ref, z_ref, v_ref, sum_ref, cnt_ref):
    x = x_ref[...]
    z = z_ref[...]
    v = v_ref[...]
    # binary_cross_entropy_with_logits: max(x,0) - x*z + log(1 + exp(-|x|))
    bce = jnp.maximum(x, 0.0) - x * z + jnp.log(1.0 + jnp.exp(-jnp.abs(x)))
    sum_ref[...] = jnp.sum(bce * v).reshape(1, 1)
    cnt_ref[...] = jnp.sum(v).reshape(1, 1)


def pallas_masked_bce(logits, labels, valid):
    s, c = pl.pallas_call(
        _masked_bce_kernel,
        out_shape=(jax.ShapeDtypeStruct((1, 1), jnp.float32),
                   jax.ShapeDtypeStruct((1, 1), jnp.float32)),
    )(logits.astype(jnp.float32), labels.astype(jnp.float32),
      valid.astype(jnp.float32))
    # guard against an all-padded batch (PyTorch would NaN; we return 0)
    return s[0, 0] / jnp.maximum(c[0, 0], 1.0)


def _contrastive_kernel(a_ref, b_ref, temp_ref, out_ref):
    a = a_ref[...]                                   # (B, D)
    b = b_ref[...]                                   # (B, D)
    a = a * jax.lax.rsqrt(jnp.maximum(jnp.sum(a * a, axis=-1, keepdims=True), 1e-24))
    b = b * jax.lax.rsqrt(jnp.maximum(jnp.sum(b * b, axis=-1, keepdims=True), 1e-24))
    scale = jnp.exp(temp_ref[...])                   # (1, 1)
    sim = jax.lax.dot_general(a, b, (((1,), (1,)), ((), ())),
                              preferred_element_type=jnp.float32) * scale
    r = jax.lax.broadcasted_iota(jnp.int32, sim.shape, 0)
    c = jax.lax.broadcasted_iota(jnp.int32, sim.shape, 1)
    diag = (r == c).astype(jnp.float32)

    def ce(axis):
        m = jnp.max(sim, axis=axis, keepdims=True)
        lse = m + jnp.log(jnp.sum(jnp.exp(sim - m), axis=axis, keepdims=True))
        picked = jnp.sum(sim * diag, axis=axis, keepdims=True)
        return jnp.mean(lse - picked)

    out_ref[...] = (0.5 * (ce(1) + ce(0))).reshape(1, 1)


def pallas_contrastive_loss(a, b, cl_temperature):
    out = pl.pallas_call(
        _contrastive_kernel,
        out_shape=jax.ShapeDtypeStruct((1, 1), jnp.float32),
    )(a.astype(jnp.float32), b.astype(jnp.float32),
      jnp.asarray(cl_temperature, jnp.float32).reshape(1, 1))
    return out[0, 0]


# ------------------------------ JAX glue ops -------------------------------

def prob_mask_like(key, shape, prob):
    return jax.random.uniform(key, shape) < prob


def get_mask_subset_with_prob(mask, prob, key):
    batch, seq_len = mask.shape
    max_masked = math.ceil(prob * seq_len)
    num_tokens = jnp.sum(mask, axis=-1, keepdims=True)
    mask_excess = (jnp.cumsum(mask.astype(jnp.int32), axis=-1)
                   > jnp.ceil(num_tokens.astype(jnp.float32) * prob))[:, :max_masked]
    rand = jnp.where(mask, jax.random.uniform(key, (batch, seq_len)), -1e9)
    _, sampled_indices = jax.lax.top_k(rand, max_masked)
    sampled_indices = jnp.where(mask_excess, 0, sampled_indices + 1)
    new_mask = jnp.zeros((batch, seq_len + 1), dtype=jnp.float32)
    new_mask = new_mask.at[jnp.arange(batch)[:, None], sampled_indices].set(1.0)
    return new_mask[:, 1:].astype(bool)


# ----------------------------- COCO forward -------------------------------

def init_params(key, *, num_tokens, gen_dim, discr_dim):
    ks = jax.random.split(key, 8)
    s = 0.05
    # MXU-side weights / embeddings stored in bf16 once (no per-call casts).
    return {
        "gen_embed": (s * jax.random.normal(ks[0], (num_tokens, gen_dim))).astype(jnp.bfloat16),
        "gen_w1": (s * jax.random.normal(ks[1], (gen_dim, gen_dim))).astype(jnp.bfloat16),
        "gen_b1": jnp.zeros((gen_dim,), jnp.float32),
        "gen_w2": (s * jax.random.normal(ks[2], (gen_dim, num_tokens))).astype(jnp.bfloat16),
        "gen_b2": jnp.zeros((num_tokens,), jnp.float32),
        "disc_embed": (s * jax.random.normal(ks[3], (num_tokens, discr_dim))).astype(jnp.bfloat16),
        "disc_w": (s * jax.random.normal(ks[4], (discr_dim, discr_dim))).astype(jnp.bfloat16),
        "disc_b": jnp.zeros((discr_dim,), jnp.float32),
        "corr_w": s * jax.random.normal(ks[5], (discr_dim, 1), jnp.float32),
        "corr_b": jnp.zeros((1,), jnp.float32),
        "cl_temperature": jnp.float32(1.0),
    }


def coco_forward(params, input_ids, key, *,
                 mask_prob=0.15, replace_prob=0.85, crop_percentage=0.5,
                 disc_weight=50.0, gen_weight=1.0, cl_weight=1.0,
                 temperature=1.0):
    b, t = input_ids.shape
    assert b > 1, "batch size need to be bigger than 1 for contrastive learning"

    cls_col = jnp.full((b, 1), CLS_ID, dtype=input_ids.dtype)
    inp = jnp.concatenate([cls_col, input_ids], axis=1)[:, :-1]      # (b, t)

    k_rep, k_mask, k_crop, k_gumbel = jax.random.split(key, 4)
    replace = prob_mask_like(k_rep, (b, t), replace_prob)
    no_mask = (inp == PAD_ID) | (inp == CLS_ID)                      # ignore set {pad, cls}
    mask = get_mask_subset_with_prob(~no_mask, mask_prob, k_mask)
    random_crop = get_mask_subset_with_prob(~no_mask, crop_percentage, k_crop)

    # masked_select(random_crop).reshape(b, crop_length), preserving order
    crop_length = int(t * crop_percentage)
    pos = jnp.arange(t)[None, :]
    crop_order = jnp.argsort(jnp.where(random_crop, pos, pos + t), axis=-1)[:, :crop_length]
    cropped = jnp.take_along_axis(inp, crop_order, axis=1)
    cropped_input = jnp.concatenate([cls_col, cropped], axis=1)
    cropped_input = jnp.pad(cropped_input, ((0, 0), (0, t - crop_length - 1)),
                            constant_values=PAD_ID)

    # TODO(synk): random_token_prob > 0 branch omitted (module default is 0.0).
    masked_input = jnp.where(mask & replace, MASK_ID, inp)
    gen_labels = jnp.where(mask, inp, PAD_ID)

    # --- generator: ONLY the masked rows (static count) go through the
    # hidden layer and the fused vocab head.  Exact: the masked CE ignores
    # PAD labels and sampling is only used at masked positions. ---
    n_mask = math.ceil(mask_prob * t)                      # max masked per row
    batch_idx = jnp.arange(b)[:, None]
    mask_order = jnp.argsort(jnp.where(mask, pos, pos + t), axis=-1)[:, :n_mask]  # (b, n_mask)
    sel_tokens = jnp.take_along_axis(masked_input, mask_order, axis=1)
    sel_labels = jnp.take_along_axis(gen_labels, mask_order, axis=1)  # PAD where not truly masked

    V = params["gen_w2"].shape[1]
    # TODO(synk): fuse the embedding row-gather into the first linear kernel
    # (scalar-prefetched token ids + pl.Element row index_map).
    emb = jnp.take(params["gen_embed"], sel_tokens.reshape(-1), axis=0)   # (b*n_mask, H) bf16
    h = pallas_linear(emb, params["gen_w1"], params["gen_b1"],
                      activation="tanh", out_dtype=jnp.bfloat16)

    # High-quality Gumbel noise from jax.random (no in-kernel HW PRNG: it has
    # no CPU/interpret lowering), only for the masked rows, streamed as bf16.
    gumbel = jax.random.gumbel(k_gumbel, (b * n_mask, V),
                               dtype=jnp.float32).astype(jnp.bfloat16)

    nll, sampled = pallas_gen_vocab_ce_sample(
        h, params["gen_w2"], params["gen_b2"], sel_labels.reshape(-1), gumbel,
        temperature=temperature)

    valid = (sel_labels.reshape(-1) != PAD_ID).astype(jnp.float32)
    mlm_loss = jnp.sum(nll * valid) / jnp.maximum(jnp.sum(valid), 1.0)

    # scatter sampled ids back to the masked positions
    sampled_full = jnp.zeros_like(inp).at[batch_idx, mask_order].set(
        sampled.reshape(b, n_mask).astype(inp.dtype))
    disc_input = jnp.where(mask, sampled_full, inp)
    disc_labels = (inp != disc_input).astype(jnp.float32)
    non_padded = (inp != PAD_ID)

    # --- discriminator fused with the width-1 correction head ---
    e_disc = jnp.take(params["disc_embed"], disc_input.reshape(-1), axis=0)   # (b*t, D) bf16
    corr = pallas_disc_corr_logits(e_disc, params["disc_w"], params["disc_b"],
                                   params["corr_w"]) + params["corr_b"][0]
    disc_logits = corr.reshape(b, t)
    disc_loss = pallas_masked_bce(disc_logits, disc_labels, non_padded)

    # --- contrastive head: only the 2*b CLS rows of the two discriminator
    # passes are needed; the stand-in discriminator is per-token, so the tiny
    # recompute is exact. ---
    cls_ids = jnp.concatenate([disc_input[:, 0], cropped_input[:, 0]], axis=0)  # (2b,)
    e_cls = jnp.take(params["disc_embed"], cls_ids, axis=0)                      # (2b, D)
    cls_hidden = pallas_linear(e_cls, params["disc_w"], params["disc_b"],
                               activation="tanh")                                # (2b, D)
    cls_corrected, cls_cropped = cls_hidden[:b], cls_hidden[b:]
    cl_loss = pallas_contrastive_loss(cls_corrected, cls_cropped,
                                      params["cl_temperature"])

    return (cl_weight * cl_loss
            + gen_weight * mlm_loss
            + disc_weight * disc_loss)


if __name__ == "__main__":
    B, T, NUM_TOKENS, GEN_DIM, DISCR_DIM = 2, 8, 32, 32, 32

    key = jax.random.PRNGKey(0)
    k_data, k_fwd = jax.random.split(key)
    # token ids in [3, NUM_TOKENS) so they are never pad/cls/mask
    input_ids = jax.random.randint(k_data, (B, T), 3, NUM_TOKENS, dtype=jnp.int32)

    params = init_params(jax.random.PRNGKey(42), num_tokens=NUM_TOKENS,
                         gen_dim=GEN_DIM, discr_dim=DISCR_DIM)

    loss = coco_forward(params, input_ids, k_fwd)
    jax.block_until_ready(loss)
    assert loss.shape == () and bool(jnp.isfinite(loss))
    print("KERNEL_OK")
</pallas_src>

<mosaic_0001>
module attributes {stable_mosaic.version = 11 : i64} {
  func.func @_linear_kernel(%arg0: i32, %arg1: memref<4x32xbf16, #tpu.memory_space<vmem>>, %arg2: memref<32x32xbf16, #tpu.memory_space<vmem>>, %arg3: memref<1x32xf32, #tpu.memory_space<vmem>>, %arg4: memref<4x32xbf16, #tpu.memory_space<vmem>>) attributes {dimension_semantics = [#tpu.dimension_semantics<parallel>], iteration_bounds = array<i64: 1>, scalar_prefetch = 0 : i64, scratch_operands = 0 : i64, tpu.core_type = #tpu.core_type<tc>, window_params = [{transform_indices = @transform_0, window_bounds = array<i64: 4, 32>}, {pipeline_mode = #tpu.pipeline_mode<synchronous>, transform_indices = @transform_1, window_bounds = array<i64: 32, 32>}, {pipeline_mode = #tpu.pipeline_mode<synchronous>, transform_indices = @transform_2, window_bounds = array<i64: 1, 32>}, {transform_indices = @transform_3, window_bounds = array<i64: 4, 32>}]} {
    %c0 = arith.constant 0 : index
    %c0_0 = arith.constant 0 : index
    %0 = vector.load %arg1[%c0, %c0_0] : memref<4x32xbf16, #tpu.memory_space<vmem>>, vector<4x32xbf16>
    %c0_1 = arith.constant 0 : index
    %c0_2 = arith.constant 0 : index
    %1 = vector.load %arg2[%c0_1, %c0_2] : memref<32x32xbf16, #tpu.memory_space<vmem>>, vector<32x32xbf16>
    %cst = arith.constant dense<0.000000e+00> : vector<4x32xf32>
    %2 = tpu.matmul %0, %1, %cst {dimension_numbers = #tpu.dot_dimension_numbers<[1], [0], [0], [1], [0, 0, 1, 1], [], []>} : vector<4x32xbf16>, vector<32x32xbf16>, vector<4x32xf32> -> vector<4x32xf32>
    %c0_3 = arith.constant 0 : index
    %c0_4 = arith.constant 0 : index
    %3 = vector.load %arg3[%c0_3, %c0_4] : memref<1x32xf32, #tpu.memory_space<vmem>>, vector<1x32xf32>
    %4 = vector.broadcast %3 : vector<1x32xf32> to vector<4x32xf32>
    %5 = arith.addf %2, %4 : vector<4x32xf32>
    %6 = math.tanh %5 : vector<4x32xf32>
    %7 = arith.truncf %6 : vector<4x32xf32> to vector<4x32xbf16>
    %c0_5 = arith.constant 0 : index
    %c0_6 = arith.constant 0 : index
    %8 = vector.load %arg4[%c0_5, %c0_6] : memref<4x32xbf16, #tpu.memory_space<vmem>>, vector<4x32xbf16>
    tpu.vector_store %arg4[%c0_5, %c0_6], %7 {strides = array<i32>} : memref<4x32xbf16, #tpu.memory_space<vmem>>, vector<4x32xbf16>,
    return
  }
  func.func @transform_0(%arg0: i32) -> (i32, i32) {
    %c0_i32 = arith.constant 0 : i32
    %c0_i32_0 = arith.constant 0 : i32
    return %arg0, %c0_i32 : i32, i32
  }
  func.func @transform_1(%arg0: i32) -> (i32, i32) {
    %c0_i32 = arith.constant 0 : i32
    %c0_i32_0 = arith.constant 0 : i32
    %c0_i32_1 = arith.constant 0 : i32
    return %c0_i32, %c0_i32_0 : i32, i32
  }
  func.func @transform_2(%arg0: i32) -> (i32, i32) {
    %c0_i32 = arith.constant 0 : i32
    %c0_i32_0 = arith.constant 0 : i32
    %c0_i32_1 = arith.constant 0 : i32
    return %c0_i32, %c0_i32_0 : i32, i32
  }
  func.func @transform_3(%arg0: i32) -> (i32, i32) {
    %c0_i32 = arith.constant 0 : i32
    %c0_i32_0 = arith.constant 0 : i32
    return %arg0, %c0_i32 : i32, i32
  }
}

</mosaic_0001>

<llo_original>
// kernel: tpu_custom_call.1
$region0: #{tpu_custom_call.1}
  #allocation0 [shape = 'u32[]', space=smem, size = 0x4, offset = 0x4, fixed_abs, tag = 'smem constant byte address 0x4 - core index']
  #allocation1 [shape = 'u32[72,128]{1,0:T(1,128)}', space=vmem, size = 0x9000, scoped, tag = 'internal scratch']
  %s0 = inlined_call_operand.hbm [shape: bf16[4,32], index: 0, kind: input, shape index: {}]
  %s1 = inlined_call_operand.hbm [shape: bf16[32,32], index: 1, kind: input, shape index: {}]
  %s2 = inlined_call_operand.vmem [shape: f32[1,32], index: 2, kind: input, shape index: {}]
  %s3 = inlined_call_operand.hbm [shape: bf16[4,32], index: 3, kind: output, shape index: {}]
  %s4 = sld [smem:[#allocation0]]
  $region30: #{tpu_custom_call.1} parent=0
    _
  %s6 = ssub.s32 1, %s4
  %s7 = scalar_select 0, %s6, %s4
  $region1: #{tpu_custom_call.1} parent=0
    #allocation2 [shape = 'u8[1024]{0}', space=vmem, size = 0x400, scoped, tag = 'input window, operand 0, single buffered']
    #allocation3 [shape = 's32[1]{0}', space=sflag, size = 0x4, scoped, tag = 'scoped memory for tpu_custom_call.1']
    #allocation4 [shape = 's32[1]{0}', space=sflag, size = 0x4, scoped, tag = 'scoped memory for tpu_custom_call.1']
    #allocation5 [shape = 'u8[8192]{0}', space=vmem, size = 0x2000, scoped, tag = 'input window, operand 1, single buffered']
    #allocation6 [shape = 's32[1]{0}', space=sflag, size = 0x4, scoped, tag = 'scoped memory for tpu_custom_call.1']
    #allocation7 [shape = 'u8[1024]{0}', space=vmem, size = 0x400, scoped, tag = 'output window, operand 0, single buffered']
    %8 = vsyncpa [#allocation3], 0
    %9 = vsyncpa [#allocation6], 0
    %10 = vsyncpa [#allocation4], 0
    // Predicated region
    $region2: #{tpu_custom_call.1} parent=1 // pred_check
      _
    $region3: #{tpu_custom_call.1} parent=1 // pred_check_branch
      %12 = sbr.rel (0) target = $region5
    $region4: #{tpu_custom_call.1} parent=1 // pred_region
      %14 = vsyncadd [#allocation3], 0
      %s16 = sshll.u32 %s0, 4
      %s17 = int_to_ptr.hbm [resolvable:$true] %s16
      %s18 = sshll.u32 [#allocation2], 4
      %s19 = int_to_ptr.vmem [resolvable:$true] %s18
      %21 = dma.hbm_to_vmem [thread:$0]  %s17, 32, %s19, [#allocation3]
    $region5: #{tpu_custom_call.1} parent=1 // pred_fallthru
      _
    // Predicated region
    $region6: #{tpu_custom_call.1} parent=1 // pred_check
      _
    $region7: #{tpu_custom_call.1} parent=1 // pred_check_branch
      %23 = sbr.rel (0) target = $region9
    $region8: #{tpu_custom_call.1} parent=1 // pred_region
      %25 = vsyncadd [#allocation6], 0
      %s26 = sshll.u32 %s1, 4
      %s27 = int_to_ptr.hbm [resolvable:$true] %s26
      %s28 = sshll.u32 [#allocation5], 4
      %s29 = int_to_ptr.vmem [resolvable:$true] %s28
      %34 = dma.hbm_to_vmem [thread:$0]  %s27, 256, %s29, [#allocation6], 64, 64, 4
    $region9: #{tpu_custom_call.1} parent=1 // pred_fallthru
      _
    // Predicated region
    $region10: #{tpu_custom_call.1} parent=1 // pred_check
      _
    $region11: #{tpu_custom_call.1} parent=1 // pred_check_branch
      %36 = sbr.rel (0) target = $region13
    $region12: #{tpu_custom_call.1} parent=1 // pred_region
      _
    $region13: #{tpu_custom_call.1} parent=1 // pred_fallthru
      _
    // Predicated region
    $region14: #{tpu_custom_call.1} parent=1 // pred_check
      _
    $region15: #{tpu_custom_call.1} parent=1 // pred_check_branch
      %38 = sbr.rel (0) target = $region17
    $region16: #{tpu_custom_call.1} parent=1 // pred_region
      %40 = dma.done [#allocation3], 32
    $region17: #{tpu_custom_call.1} parent=1 // pred_fallthru
      _
    // Predicated region
    $region18: #{tpu_custom_call.1} parent=1 // pred_check
      _
    $region19: #{tpu_custom_call.1} parent=1 // pred_check_branch
      %42 = sbr.rel (0) target = $region21
    $region20: #{tpu_custom_call.1} parent=1 // pred_region
      %44 = dma.done [#allocation6], 256
    $region21: #{tpu_custom_call.1} parent=1 // pred_fallthru
      _
    %v46 = vld [vmem:[#allocation2] sm:$0x3]
    %v47 = vld [vmem:[#allocation5] sm:$0xf]
    %v48 = vld [vmem:[#allocation5 + $0x4] sm:$0xf]
    %v49 = vld [vmem:[#allocation5 + $0x8] sm:$0xf]
    %v50 = vld [vmem:[#allocation5 + $0xc] sm:$0xf]
    %v51 = vld [vmem:[%s2] sm:$0x1]
    %v53 = vperm.slane %v51, 0
    %v59 = vunpack.c.l.b16 %v47
    %v60 = vunpack.c.l.b16 %v48
    %v61 = vunpack.c.l.b16 %v49
    %v62 = vunpack.c.l.b16 %v50
    %v63 = vpack.c.b16 %v60, %v59
    %v64 = vpack.c.b16 %v62, %v61
    %vm67 = vcmask 261120
    %v69 = vsel %vm67, %v46, 0
    %71 = vmatpush.bf16.msra.mxu0 0
    %72 = vmatpush.bf16.msra.mxu0 0
    %73 = vmatpush.bf16.msra.mxu0 0
    %74 = vmatpush.bf16.msra.mxu0 0
    %75 = vmatpush.bf16.msra.mxu0 0
    %76 = vmatpush.bf16.msra.mxu0 0
    %77 = vmatpush.bf16.msra.mxu0 %v64
    %78 = vmatpush.bf16.msra.mxu0 %v63
    %79 = vmatmul.bf16.gmra.mxu0 %v69
    %v80 = vpop.f32.mrf.mxu0
    %v81 = vadd.f32 %v53, %v80
    %v82 = vpop.f32.mrf.mxu0
    %83 = vdwg.mxu0
    %v84 = vtanh.pop %v81
    %v85 = vpack.c.bf16 %v84, %v84
    %vm86 = vcmask 254976
    %87 = vst.msk [vmem:[#allocation7] sm:$0x3] %vm86, %v85
    // Predicated region
    $region22: #{tpu_custom_call.1} parent=1 // pred_check
      _
    $region23: #{tpu_custom_call.1} parent=1 // pred_check_branch
      %89 = sbr.rel (0) target = $region25
    $region24: #{tpu_custom_call.1} parent=1 // pred_region
      %91 = vsyncadd [#allocation4], 0
      %s93 = sshll.u32 [#allocation7], 4
      %s94 = int_to_ptr.vmem [resolvable:$true] %s93
      %s95 = sshll.u32 %s3, 4
      %s96 = int_to_ptr.hbm [resolvable:$true] %s95
      %98 = dma.vmem_to_hbm [thread:$0]  %s94, 32, %s96, [#allocation4]
    $region25: #{tpu_custom_call.1} parent=1 // pred_fallthru
      _
    // Predicated region
    $region26: #{tpu_custom_call.1} parent=1 // pred_check
      _
    $region27: #{tpu_custom_call.1} parent=1 // pred_check_branch
      %100 = sbr.rel (0) target = $region29
    $region28: #{tpu_custom_call.1} parent=1 // pred_region
      %102 = dma.done [#allocation4], 32
    $region29: #{tpu_custom_call.1} parent=1 // pred_fallthru
      _
    %103 = vsyncpa [#allocation3], 1
    %104 = vsyncpa [#allocation6], 1
    %105 = vsyncpa [#allocation4], 1

</llo_original>
